<compile_context>
chip_gen: v7x
topology: tpu7x:2x2x1
jax: 0.10.0
libtpu: 0.0.40
codegen_flags: <defaults>
</compile_context>

<pallas_src>
import jax
import jax.numpy as jnp
from jax.experimental import pallas as pl
from jax.experimental.pallas import tpu as pltpu


def _round_up(n: int, m: int) -> int:
    return ((n + m - 1) // m) * m


def _mlp_classifier_kernel(x_ref, w1_ref, b1_ref, w2_ref, b2_ref, out_ref):
    # Fused relu(x @ W1 + b1) @ W2 + b2 for one batch tile, all in VMEM.
    # x arrives f32 and is cast to bf16 here (single HBM read of x);
    # MXU accumulates in f32; bias add + ReLU run in f32 on the VPU.
    x = x_ref[...].astype(jnp.bfloat16)
    h = jnp.dot(x, w1_ref[...], preferred_element_type=jnp.float32)
    h = jnp.maximum(h + b1_ref[...], 0.0)                    # ReLU (f32)
    # Dropout(p) in eval mode is the identity -> no-op here.
    logits = jnp.dot(h.astype(w2_ref.dtype), w2_ref[...],
                     preferred_element_type=jnp.float32)
    out_ref[...] = (logits + b2_ref[...]).astype(out_ref.dtype)


def prepare_params(w1, b1, w2, b2, *, compute_dtype=jnp.bfloat16):
    """One-time weight preparation (call at init, NOT per forward call).

    Pads the hidden dim H to a lane multiple (128) and casts the weight
    matrices to bf16. Zero-padded W1 columns / b1 entries and zero-padded W2
    rows guarantee the padded hidden slots contribute exactly nothing.

    w1: (F, H), b1: (1, H), w2: (H, C), b2: (1, C)  (all float32)
    returns (w1p, b1p, w2p, b2p) ready for `linear_classifier_forward`.
    """
    F, H = w1.shape
    C = w2.shape[1]
    H_p = _round_up(H, 128)

    w1p = jnp.zeros((F, H_p), compute_dtype).at[:, :H].set(w1.astype(compute_dtype))
    b1p = jnp.zeros((1, H_p), jnp.float32).at[:, :H].set(b1.astype(jnp.float32))
    w2p = jnp.zeros((H_p, C), compute_dtype).at[:H, :].set(w2.astype(compute_dtype))
    b2p = b2.astype(jnp.float32).reshape(1, C)
    return w1p, b1p, w2p, b2p


def linear_classifier_forward(x, w1p, b1p, w2p, b2p, *, tile_b=256):
    """Forward pass of LinearClassifier ('mlp' head, no backbone, eval mode).

    x           : (B, F) float32 (unpadded, streamed through VMEM in batch tiles)
    w1p/b1p/w2p/b2p : outputs of `prepare_params` (VMEM-resident across tiles)
    returns logits (B, C) float32
    """
    B, F = x.shape
    F_w, H_p = w1p.shape
    C = w2p.shape[1]
    assert F_w == F, "w1p feature dim must match x"

    # Batch tile: multiple of 16 (sublane-safe for f32 and bf16), capped by
    # tile_b, and sized so the grid has >= 2 steps whenever B allows (so v7x
    # can shard tiles over its 2 TensorCores and the x DMA can pipeline).
    tb_cap = max(16, (tile_b // 16) * 16)
    tb_half = max(16, _round_up(pl.cdiv(B, 2), 16))
    TB = min(tb_cap, tb_half)
    grid = (pl.cdiv(B, TB),)    # last tile may be partial; Pallas masks it

    cost = pl.CostEstimate(
        flops=2 * B * (F * H_p + H_p * C),
        transcendentals=0,
        bytes_accessed=(B * F * 4            # stream x (f32, read once)
                        + F * H_p * 2        # W1 (bf16, resident)
                        + H_p * C * 2        # W2 (bf16, resident)
                        + (H_p + C) * 4      # biases (f32, resident)
                        + B * C * 4),        # logits out (f32, unpadded C)
    )

    return pl.pallas_call(
        _mlp_classifier_kernel,
        out_shape=jax.ShapeDtypeStruct((B, C), jnp.float32),
        grid_spec=pltpu.PrefetchScalarGridSpec(
            num_scalar_prefetch=0,
            grid=grid,
            in_specs=[
                # x: streamed per batch tile, full (unpadded) feature width.
                # (If DMA ever shows exposed, add pipeline_mode=pl.Buffered(3).)
                pl.BlockSpec((TB, F), lambda i: (i, 0)),
                pl.BlockSpec((F, H_p), lambda i: (0, 0)),    # W1: VMEM-resident
                pl.BlockSpec((1, H_p), lambda i: (0, 0)),    # b1: VMEM-resident
                pl.BlockSpec((H_p, C), lambda i: (0, 0)),    # W2: VMEM-resident
                pl.BlockSpec((1, C), lambda i: (0, 0)),      # b2: VMEM-resident
            ],
            # Unpadded-C output block: small masked store, ~12.8x less
            # writeback than a 128-padded C, and no post-kernel slice needed.
            out_specs=pl.BlockSpec((TB, C), lambda i: (i, 0)),
        ),
        compiler_params=pltpu.CompilerParams(
            dimension_semantics=("parallel",),     # shards tiles over v7x's 2 TCs
            vmem_limit_bytes=32 * 1024 * 1024,     # safe on v5e/v6e/v7x
        ),
        cost_estimate=cost,
    )(x, w1p, b1p, w2p, b2p)


def init_params(key, feature_dim, hidden_dim, num_classes):
    """Deterministic init mirroring nn.Linear default: U(-1/sqrt(fan_in), 1/sqrt(fan_in))."""
    k1, k2, k3, k4 = jax.random.split(key, 4)
    lim1 = 1.0 / jnp.sqrt(feature_dim)
    lim2 = 1.0 / jnp.sqrt(hidden_dim)
    w1 = jax.random.uniform(k1, (feature_dim, hidden_dim), jnp.float32, -lim1, lim1)
    b1 = jax.random.uniform(k2, (1, hidden_dim), jnp.float32, -lim1, lim1)
    w2 = jax.random.uniform(k3, (hidden_dim, num_classes), jnp.float32, -lim2, lim2)
    b2 = jax.random.uniform(k4, (1, num_classes), jnp.float32, -lim2, lim2)
    return w1, b1, w2, b2


if __name__ == "__main__":
    # Small shapes consistent with the 'no_backbone' + 'mlp' configuration.
    # B=48 gives a 2-step grid (TB=32) with a partial last tile, exercising
    # both the pipelined path and the masked-edge path.
    B, F, H, C = 48, 32, 64, 10

    key = jax.random.PRNGKey(0)
    kx, kp = jax.random.split(key)
    x = jax.random.normal(kx, (B, F), dtype=jnp.float32)
    w1, b1, w2, b2 = init_params(kp, F, H, C)

    # One-time weight prep (hoisted out of the per-call forward).
    params = prepare_params(w1, b1, w2, b2)

    fwd = jax.jit(linear_classifier_forward)
    logits = fwd(x, *params)
    jax.block_until_ready(logits)
    assert logits.shape == (B, C)

    # Reference 1: same bf16-input / f32-accumulate math as the kernel.
    bf = jnp.bfloat16
    h_ref = jnp.maximum(
        jnp.dot(x.astype(bf), w1.astype(bf), preferred_element_type=jnp.float32) + b1,
        0.0)
    ref_bf16 = jnp.dot(h_ref.astype(bf), w2.astype(bf),
                       preferred_element_type=jnp.float32) + b2
    assert jnp.allclose(logits, ref_bf16, atol=1e-2, rtol=1e-2)

    # Reference 2: pure f32 math (PyTorch fidelity bound; bf16 inputs deviate
    # only at the ~0.4% relative level for these scales).
    ref_f32 = jnp.maximum(x @ w1 + b1, 0.0) @ w2 + b2
    assert jnp.allclose(logits, ref_f32, atol=1e-1, rtol=1e-1)

    # TODO(synk): CNNEncoder / BertAudioEmbeddings backbone paths are external
    # modules not defined in the reference source; only the Identity backbone
    # ('no_backbone') path is implemented.
    print("KERNEL_OK")
</pallas_src>

<mosaic_0001>
module attributes {stable_mosaic.version = 11 : i64} {
  func.func @_mlp_classifier_kernel(%arg0: i32, %arg1: memref<32x32xf32, #tpu.memory_space<vmem>>, %arg2: memref<32x128xbf16, #tpu.memory_space<vmem>>, %arg3: memref<1x128xf32, #tpu.memory_space<vmem>>, %arg4: memref<128x10xbf16, #tpu.memory_space<vmem>>, %arg5: memref<1x10xf32, #tpu.memory_space<vmem>>, %arg6: memref<32x10xf32, #tpu.memory_space<vmem>>) attributes {dimension_semantics = [#tpu.dimension_semantics<parallel>], iteration_bounds = array<i64: 2>, scalar_prefetch = 0 : i64, scratch_operands = 0 : i64, tpu.core_type = #tpu.core_type<tc>, window_params = [{transform_indices = @transform_0, window_bounds = array<i64: 32, 32>}, {pipeline_mode = #tpu.pipeline_mode<synchronous>, transform_indices = @transform_1, window_bounds = array<i64: 32, 128>}, {pipeline_mode = #tpu.pipeline_mode<synchronous>, transform_indices = @transform_2, window_bounds = array<i64: 1, 128>}, {pipeline_mode = #tpu.pipeline_mode<synchronous>, transform_indices = @transform_3, window_bounds = array<i64: 128, 10>}, {pipeline_mode = #tpu.pipeline_mode<synchronous>, transform_indices = @transform_4, window_bounds = array<i64: 1, 10>}, {transform_indices = @transform_5, window_bounds = array<i64: 32, 10>}]} {
    %c0 = arith.constant 0 : index
    %c0_0 = arith.constant 0 : index
    %0 = vector.load %arg1[%c0, %c0_0] : memref<32x32xf32, #tpu.memory_space<vmem>>, vector<32x32xf32>
    %1 = arith.truncf %0 : vector<32x32xf32> to vector<32x32xbf16>
    %c0_1 = arith.constant 0 : index
    %c0_2 = arith.constant 0 : index
    %2 = vector.load %arg2[%c0_1, %c0_2] : memref<32x128xbf16, #tpu.memory_space<vmem>>, vector<32x128xbf16>
    %cst = arith.constant dense<0.000000e+00> : vector<32x128xf32>
    %3 = tpu.matmul %1, %2, %cst {dimension_numbers = #tpu.dot_dimension_numbers<[1], [0], [0], [1], [0, 0, 1, 1], [], []>} : vector<32x32xbf16>, vector<32x128xbf16>, vector<32x128xf32> -> vector<32x128xf32>
    %c0_3 = arith.constant 0 : index
    %c0_4 = arith.constant 0 : index
    %4 = vector.load %arg3[%c0_3, %c0_4] : memref<1x128xf32, #tpu.memory_space<vmem>>, vector<1x128xf32>
    %5 = vector.broadcast %4 : vector<1x128xf32> to vector<32x128xf32>
    %6 = arith.addf %3, %5 : vector<32x128xf32>
    %cst_5 = arith.constant 0.000000e+00 : f32
    %7 = vector.broadcast %cst_5 : f32 to vector<32x128xf32>
    %8 = arith.maximumf %6, %7 : vector<32x128xf32>
    %9 = arith.truncf %8 : vector<32x128xf32> to vector<32x128xbf16>
    %c0_6 = arith.constant 0 : index
    %c0_7 = arith.constant 0 : index
    %10 = vector.load %arg4[%c0_6, %c0_7] : memref<128x10xbf16, #tpu.memory_space<vmem>>, vector<128x10xbf16>
    %cst_8 = arith.constant dense<0.000000e+00> : vector<32x10xf32>
    %11 = tpu.matmul %9, %10, %cst_8 {dimension_numbers = #tpu.dot_dimension_numbers<[1], [0], [0], [1], [0, 0, 1, 1], [], []>} : vector<32x128xbf16>, vector<128x10xbf16>, vector<32x10xf32> -> vector<32x10xf32>
    %c0_9 = arith.constant 0 : index
    %c0_10 = arith.constant 0 : index
    %12 = vector.load %arg5[%c0_9, %c0_10] : memref<1x10xf32, #tpu.memory_space<vmem>>, vector<1x10xf32>
    %13 = vector.broadcast %12 : vector<1x10xf32> to vector<32x10xf32>
    %14 = arith.addf %11, %13 : vector<32x10xf32>
    %c0_11 = arith.constant 0 : index
    %c0_12 = arith.constant 0 : index
    %15 = vector.load %arg6[%c0_11, %c0_12] : memref<32x10xf32, #tpu.memory_space<vmem>>, vector<32x10xf32>
    tpu.vector_store %arg6[%c0_11, %c0_12], %14 {strides = array<i32>} : memref<32x10xf32, #tpu.memory_space<vmem>>, vector<32x10xf32>,
    return
  }
  func.func @transform_0(%arg0: i32) -> (i32, i32) {
    %c0_i32 = arith.constant 0 : i32
    %c0_i32_0 = arith.constant 0 : i32
    return %arg0, %c0_i32 : i32, i32
  }
  func.func @transform_1(%arg0: i32) -> (i32, i32) {
    %c0_i32 = arith.constant 0 : i32
    %c0_i32_0 = arith.constant 0 : i32
    %c0_i32_1 = arith.constant 0 : i32
    return %c0_i32, %c0_i32_0 : i32, i32
  }
  func.func @transform_2(%arg0: i32) -> (i32, i32) {
    %c0_i32 = arith.constant 0 : i32
    %c0_i32_0 = arith.constant 0 : i32
    %c0_i32_1 = arith.constant 0 : i32
    return %c0_i32, %c0_i32_0 : i32, i32
  }
  func.func @transform_3(%arg0: i32) -> (i32, i32) {
    %c0_i32 = arith.constant 0 : i32
    %c0_i32_0 = arith.constant 0 : i32
    %c0_i32_1 = arith.constant 0 : i32
    return %c0_i32, %c0_i32_0 : i32, i32
  }
  func.func @transform_4(%arg0: i32) -> (i32, i32) {
    %c0_i32 = arith.constant 0 : i32
    %c0_i32_0 = arith.constant 0 : i32
    %c0_i32_1 = arith.constant 0 : i32
    return %c0_i32, %c0_i32_0 : i32, i32
  }
  func.func @transform_5(%arg0: i32) -> (i32, i32) {
    %c0_i32 = arith.constant 0 : i32
    %c0_i32_0 = arith.constant 0 : i32
    return %arg0, %c0_i32 : i32, i32
  }
}

</mosaic_0001>

<llo_original>
// kernel: linear_classifier_forward.1
$region0: #{linear_classifier_forward.1}
  #allocation0 [shape = 'u32[]', space=smem, size = 0x4, offset = 0x4, fixed_abs, tag = 'smem constant byte address 0x4 - core index']
  #allocation1 [shape = 'u32[144,128]{1,0:T(1,128)}', space=vmem, size = 0x12000, scoped, tag = 'internal scratch']
  %s0 = inlined_call_operand.vmem [shape: f32[48,32], index: 0, kind: input, shape index: {}]
  %s1 = inlined_call_operand.vmem [shape: bf16[32,128], index: 1, kind: input, shape index: {}]
  %s2 = inlined_call_operand.vmem [shape: f32[1,128], index: 2, kind: input, shape index: {}]
  %s3 = inlined_call_operand.vmem [shape: bf16[128,10], index: 3, kind: input, shape index: {}]
  %s4 = inlined_call_operand.vmem [shape: f32[1,10], index: 4, kind: input, shape index: {}]
  %s5 = inlined_call_operand.vmem [shape: f32[48,10], index: 5, kind: output, shape index: {}]
  %s6 = sld [smem:[#allocation0]]
  $region101: #{linear_classifier_forward.1} parent=0
    _
  %s8 = ssub.s32 1, %s6
  %s9 = scalar_select 0, %s8, %s6
  $region1: #{linear_classifier_forward.1} parent=0
    #allocation2 [shape = 'u8[32768]{0}', space=vmem, size = 0x8000, scoped, tag = 'output window, operand 0']
    loop: start=0, step=1, limit=4
    $region2: #{linear_classifier_forward.1} parent=1 // loop_pre_header
      _
    $region3: #{linear_classifier_forward.1} parent=1 // loop_header
      %s11 = sphi 0, %s15
      %p12 = scmp.ge.s32.totalorder %s11, 4
      %s21 = sphi 0, %s23
      %s24 = sphi 0, %s21
      %s25 = sphi 0, %s24
      %s41 = sphi 0, %s25
      %s45 = sphi 0, %s45
      %s47 = sphi 0, %s45
      %s48 = sphi 0, %s47
      %s62 = sphi 0, %s48
      %s66 = sphi 0, %s66
      %s68 = sphi 0, %s66
      %s69 = sphi 0, %s68
      %s83 = sphi 0, %s69
      %s87 = sphi 0, %s87
      %s89 = sphi 0, %s87
      %s90 = sphi 0, %s89
      %s104 = sphi 0, %s90
      %s108 = sphi 0, %s108
      %s110 = sphi 0, %s108
      %s111 = sphi 0, %s110
      %s125 = sphi 0, %s111
      %s131 = sphi 0, %s133
      %s134 = sphi 0, %s131
      %s135 = sphi 0, %s134
      %s151 = sphi 0, %s135
    $region4: #{linear_classifier_forward.1} parent=1 // loop_header_branch
      %14 = sbr.rel (%p12) target = $region8
    $region5: #{linear_classifier_forward.1} parent=1 // loop_body
      %s16 = ssub.s32 %s11, 1
      %s17 = ssub.s32 %s11, 2
      %s18 = sadd.s32 %s11, 1
      %s19 = ssub.s32 %s11, %s18
      %p20 = scmp.eq.s32.totalorder %s19, 0
      %s22 = sadd.s32 %s21, 1
      %s23 = scalar_select %p20, %s21, %s22
      %p26 = pneg %p20
      %p27 = scmp.eq.s32.totalorder %s11, 1
      %p28 = por %p26, %p27
      %p29 = scmp.ne.s32.totalorder %s21, %s24
      %p30 = scmp.eq.s32.totalorder %s11, 0
      %p31 = por %p29, %p30
      %p32 = scmp.ne.s32.totalorder %s21, %s24
      %p33 = scmp.eq.s32.totalorder %s16, 1
      %p34 = por %p32, %p33
      %p35 = scmp.ne.s32.totalorder %s24, %s25
      %p36 = scmp.eq.s32.totalorder %s16, 0
      %p37 = por %p35, %p36
      %p38 = scmp.ne.s32.totalorder %s24, %s25
      %p39 = scmp.eq.s32.totalorder %s17, 1
      %p40 = por %p38, %p39
      %p42 = scmp.ne.s32.totalorder %s25, %s41
      %p43 = scmp.eq.s32.totalorder %s17, 0
      %p44 = por %p42, %p43
      %s46 = sadd.s32 %s45, 1
      %p49 = scmp.eq.s32.totalorder %s11, 1
      %p50 = scmp.ne.s32.totalorder %s45, %s47
      %p51 = scmp.eq.s32.totalorder %s11, 0
      %p52 = por %p50, %p51
      %p53 = scmp.ne.s32.totalorder %s45, %s47
      %p54 = scmp.eq.s32.totalorder %s16, 1
      %p55 = por %p53, %p54
      %p56 = scmp.ne.s32.totalorder %s47, %s48
      %p57 = scmp.eq.s32.totalorder %s16, 0
      %p58 = por %p56, %p57
      %p59 = scmp.ne.s32.totalorder %s47, %s48
      %p60 = scmp.eq.s32.totalorder %s17, 1
      %p61 = por %p59, %p60
      %p63 = scmp.ne.s32.totalorder %s48, %s62
      %p64 = scmp.eq.s32.totalorder %s17, 0
      %p65 = por %p63, %p64
      %s67 = sadd.s32 %s66, 1
      %p70 = scmp.eq.s32.totalorder %s11, 1
      %p71 = scmp.ne.s32.totalorder %s66, %s68
      %p72 = scmp.eq.s32.totalorder %s11, 0
      %p73 = por %p71, %p72
      %p74 = scmp.ne.s32.totalorder %s66, %s68
      %p75 = scmp.eq.s32.totalorder %s16, 1
      %p76 = por %p74, %p75
      %p77 = scmp.ne.s32.totalorder %s68, %s69
      %p78 = scmp.eq.s32.totalorder %s16, 0
      %p79 = por %p77, %p78
      %p80 = scmp.ne.s32.totalorder %s68, %s69
      %p81 = scmp.eq.s32.totalorder %s17, 1
      %p82 = por %p80, %p81
      %p84 = scmp.ne.s32.totalorder %s69, %s83
      %p85 = scmp.eq.s32.totalorder %s17, 0
      %p86 = por %p84, %p85
      %s88 = sadd.s32 %s87, 1
      %p91 = scmp.eq.s32.totalorder %s11, 1
      %p92 = scmp.ne.s32.totalorder %s87, %s89
      %p93 = scmp.eq.s32.totalorder %s11, 0
      %p94 = por %p92, %p93
      %p95 = scmp.ne.s32.totalorder %s87, %s89
      %p96 = scmp.eq.s32.totalorder %s16, 1
      %p97 = por %p95, %p96
      %p98 = scmp.ne.s32.totalorder %s89, %s90
      %p99 = scmp.eq.s32.totalorder %s16, 0
      %p100 = por %p98, %p99
      %p101 = scmp.ne.s32.totalorder %s89, %s90
      %p102 = scmp.eq.s32.totalorder %s17, 1
      %p103 = por %p101, %p102
      %p105 = scmp.ne.s32.totalorder %s90, %s104
      %p106 = scmp.eq.s32.totalorder %s17, 0
      %p107 = por %p105, %p106
      %s109 = sadd.s32 %s108, 1
      %p112 = scmp.eq.s32.totalorder %s11, 1
      %p113 = scmp.ne.s32.totalorder %s108, %s110
      %p114 = scmp.eq.s32.totalorder %s11, 0
      %p115 = por %p113, %p114
      %p116 = scmp.ne.s32.totalorder %s108, %s110
      %p117 = scmp.eq.s32.totalorder %s16, 1
      %p118 = por %p116, %p117
      %p119 = scmp.ne.s32.totalorder %s110, %s111
      %p120 = scmp.eq.s32.totalorder %s16, 0
      %p121 = por %p119, %p120
      %p122 = scmp.ne.s32.totalorder %s110, %s111
      %p123 = scmp.eq.s32.totalorder %s17, 1
      %p124 = por %p122, %p123
      %p126 = scmp.ne.s32.totalorder %s111, %s125
      %p127 = scmp.eq.s32.totalorder %s17, 0
      %p128 = por %p126, %p127
      %s129 = ssub.s32 %s11, %s18
      %p130 = scmp.eq.s32.totalorder %s129, 0
      %s132 = sadd.s32 %s131, 1
      %s133 = scalar_select %p130, %s131, %s132
      %p136 = pneg %p130
      %p137 = scmp.eq.s32.totalorder %s11, 1
      %p138 = por %p136, %p137
      %p139 = scmp.ne.s32.totalorder %s131, %s134
      %p140 = scmp.eq.s32.totalorder %s11, 0
      %p141 = por %p139, %p140
      %p142 = scmp.ne.s32.totalorder %s131, %s134
      %p143 = scmp.eq.s32.totalorder %s16, 1
      %p144 = por %p142, %p143
      %p145 = scmp.ne.s32.totalorder %s134, %s135
      %p146 = scmp.eq.s32.totalorder %s16, 0
      %p147 = por %p145, %p146
      %p148 = scmp.ne.s32.totalorder %s134, %s135
      %p149 = scmp.eq.s32.totalorder %s17, 1
      %p150 = por %p148, %p149
      %p152 = scmp.ne.s32.totalorder %s135, %s151
      %p153 = scmp.eq.s32.totalorder %s17, 0
      %p154 = por %p152, %p153
      %p155 = scmp.le.s32.totalorder 1, %s11
      %p156 = scmp.lt.s32.totalorder %s11, 3
      %p157 = pnand %p155, %p156
      %p158 = pneg %p157
      // Predicated region
      $region9: #{linear_classifier_forward.1} parent=5 // pred_check
        _
      $region10: #{linear_classifier_forward.1} parent=5 // pred_check_branch
        %160 = sbr.rel (%p157) target = $region12
      $region11: #{linear_classifier_forward.1} parent=5 // pred_region
        %s161 = ssub.s32 %s11, 1
        // Predicated region
        $region13: #{linear_classifier_forward.1} parent=11 // pred_check
          %p162 = pneg %p58
        $region14: #{linear_classifier_forward.1} parent=11 // pred_check_branch
          %164 = sbr.rel (%p162) target = $region16
        $region15: #{linear_classifier_forward.1} parent=11 // pred_region
          _
        $region16: #{linear_classifier_forward.1} parent=11 // pred_fallthru
          _
        // Predicated region
        $region17: #{linear_classifier_forward.1} parent=11 // pred_check
          %p165 = pneg %p79
        $region18: #{linear_classifier_forward.1} parent=11 // pred_check_branch
          %167 = sbr.rel (%p165) target = $region20
        $region19: #{linear_classifier_forward.1} parent=11 // pred_region
          _
        $region20: #{linear_classifier_forward.1} parent=11 // pred_fallthru
          _
        // Predicated region
        $region21: #{linear_classifier_forward.1} parent=11 // pred_check
          %p168 = pneg %p100
        $region22: #{linear_classifier_forward.1} parent=11 // pred_check_branch
          %170 = sbr.rel (%p168) target = $region24
        $region23: #{linear_classifier_forward.1} parent=11 // pred_region
          _
        $region24: #{linear_classifier_forward.1} parent=11 // pred_fallthru
          _
        // Predicated region
        $region25: #{linear_classifier_forward.1} parent=11 // pred_check
          %p171 = pneg %p121
        $region26: #{linear_classifier_forward.1} parent=11 // pred_check_branch
          %173 = sbr.rel (%p171) target = $region28
        $region27: #{linear_classifier_forward.1} parent=11 // pred_region
          _
        $region28: #{linear_classifier_forward.1} parent=11 // pred_fallthru
          _
      $region12: #{linear_classifier_forward.1} parent=5 // pred_fallthru
        _
      %p174 = scmp.lt.s32.totalorder %s11, 2
      // Predicated region
      $region29: #{linear_classifier_forward.1} parent=5 // pred_check
        %p175 = pneg %p174
      $region30: #{linear_classifier_forward.1} parent=5 // pred_check_branch
        %177 = sbr.rel (%p175) target = $region32
      $region31: #{linear_classifier_forward.1} parent=5 // pred_region
        // Predicated region
        $region33: #{linear_classifier_forward.1} parent=31 // pred_check
          %p178 = pneg %p31
        $region34: #{linear_classifier_forward.1} parent=31 // pred_check_branch
          %180 = sbr.rel (%p178) target = $region36
        $region35: #{linear_classifier_forward.1} parent=31 // pred_region
          %s181 = smul.u32 4, %s11
          %s182 = ssub.s32 6, %s181
          %p183 = scmp.lt.s32.totalorder %s182, 4
          %s184 = scalar_select %p183, %s182, 4
          %s185 = smul.u32 128, %s184
          %p186 = scmp.lt.s32.totalorder %s181, 5
          %s187 = scalar_select %p186, %s181, 5
          %s188 = smul.addr %s187, 8
          %s189 = scalar_lea.vmem %s0, %s188
          %s190 = smul.u32 4, %s11
          %s191 = ssub.s32 6, %s190
          %p192 = scmp.lt.s32.totalorder %s191, 4
          %s193 = scalar_select %p192, %s191, 4
          %s194 = smul.u32 128, %s193
        $region36: #{linear_classifier_forward.1} parent=31 // pred_fallthru
          _
      $region32: #{linear_classifier_forward.1} parent=5 // pred_fallthru
        _
      %p195 = scmp.le.s32.totalorder 1, %s11
      %p196 = scmp.lt.s32.totalorder %s11, 3
      %p197 = pnand %p195, %p196
      %p198 = pneg %p197
      // Predicated region
      $region37: #{linear_classifier_forward.1} parent=5 // pred_check
        _
      $region38: #{linear_classifier_forward.1} parent=5 // pred_check_branch
        %200 = sbr.rel (%p197) target = $region40
      $region39: #{linear_classifier_forward.1} parent=5 // pred_region
        %s201 = ssub.s32 %s11, 1
        %s202 = smul.u32 4, %s16
        %s203 = ssub.s32 6, %s202
        %p204 = scmp.lt.s32.totalorder %s203, 4
        %s205 = scalar_select %p204, %s203, 4
        %s206 = smul.u32 128, %s205
        %p207 = scmp.lt.s32.totalorder %s202, 5
        %s208 = scalar_select %p207, %s202, 5
        %s209 = smul.addr %s208, 8
        %s210 = scalar_lea.vmem %s0, %s209
        %p211 = pneg %p37
        %p212 = pneg %p34
        %p213 = pneg %p58
        %p214 = pneg %p55
        %p215 = pneg %p79
        %p216 = pneg %p76
        %p217 = pneg %p100
        %p218 = pneg %p97
        %p219 = pneg %p121
        %p220 = pneg %p118
        %p221 = pneg %p147
        %p222 = pneg %p144
        %s223 = sand.u32 %s134, 1
        %s224 = sand.u32 %s134, 1
        %s225 = smul.addr %s224, 32
        %s226 = scalar_lea.vmem [#allocation2], %s225
        %s227 = smul.u32 4, %s16
        %s228 = ssub.s32 6, %s227
        %p229 = scmp.lt.s32.totalorder %s228, 4
        %s230 = scalar_select %p229, %s228, 4
        %s231 = smul.u32 128, %s230
        %p232 = scmp.lt.s32.totalorder %s227, 5
        %s233 = scalar_select %p232, %s227, 5
        %s234 = smul.addr %s233, 8
        %s235 = scalar_lea.vmem %s0, %s234
        %s236 = smul.u32 4, %s16
        %s237 = ssub.s32 6, %s236
        %p238 = scmp.lt.s32.totalorder %s237, 4
        %s239 = scalar_select %p238, %s237, 4
        %s240 = smul.u32 128, %s239
        %s241 = smul.u32 4, %s16
        %s242 = ssub.s32 6, %s241
        %p243 = scmp.lt.s32.totalorder %s242, 4
        %s244 = scalar_select %p243, %s242, 4
        %s245 = smul.u32 128, %s244
        %v247 = vld [vmem:[%s235] sm:$0xff]
        %v248 = vld [vmem:[%s235 + $0x8] sm:$0xff]
        %v249 = vld [vmem:[%s235 + $0x10] sm:$0xff]
        %v250 = vld [vmem:[%s235 + $0x18] sm:$0xff]
        %v251 = vpack.c.bf16 %v248, %v247
        %v252 = vpack.c.bf16 %v250, %v249
        %v253 = vld [vmem:[%s1] sm:$0xf]
        %v254 = vld [vmem:[%s1 + $0x4] sm:$0xf]
        %v255 = vld [vmem:[%s1 + $0x8] sm:$0xf]
        %v256 = vld [vmem:[%s1 + $0xc] sm:$0xf]
        %v257 = vld [vmem:[%s2] sm:$0x1]
        %v259 = vlaneseq
        %v260 = vshrl.u32 %v259, 7
        %v261 = vsub.s32 0, %v260
        %v262 = vrot.slane %v257, %v261
        %v268 = vunpack.c.l.b16 %v253
        %v269 = vunpack.c.l.b16 %v254
        %v270 = vunpack.c.l.b16 %v255
        %v271 = vunpack.c.l.b16 %v256
        %v272 = vpack.c.b16 %v269, %v268
        %v273 = vpack.c.b16 %v271, %v270
        %vm276 = vcmask 261120
        %v278 = vsel %vm276, %v251, 0
        %v281 = vsel %vm276, %v252, 0
        %283 = vmatprep.subr.bf16.mxu0 0
        %284 = vmatpush1.bf16.msra.mxu0 %v272
        %285 = vmatprep.subr.bf16.mxu0 0
        %286 = vmatpush1.bf16.msra.mxu0 %v273
        %287 = vmatprep.subr.bf16.mxu0 0
        %288 = vmatpush1.bf16.msra.mxu0 0
        %289 = vmatprep.subr.bf16.mxu0 0
        %290 = vmatpush1.bf16.msra.mxu0 0
        %291 = vmatprep.subr.bf16.mxu0 0
        %292 = vmatpush1.bf16.msra.mxu0 0
        %293 = vmatprep.subr.bf16.mxu0 0
        %294 = vmatpush1.bf16.msra.mxu0 0
        %295 = vmatprep.subr.bf16.mxu0 0
        %296 = vmatpush1.bf16.msra.mxu0 0
        %297 = vmatprep.subr.bf16.mxu0 0
        %298 = vmatpush1.bf16.msra.mxu0 0
        %299 = vmatprep.subr.bf16.mxu0 0
        %300 = vmatpush1.bf16.msra.mxu0 0
        %301 = vmatprep.subr.bf16.mxu0 0
        %302 = vmatpush1.bf16.msra.mxu0 0
        %303 = vmatprep.subr.bf16.mxu0 0
        %304 = vmatpush1.bf16.msra.mxu0 0
        %305 = vmatprep.subr.bf16.mxu0 0
        %306 = vmatpush1.bf16.msra.mxu0 0
        %307 = vmatprep.subr.bf16.mxu0 0
        %308 = vmatpush1.bf16.msra.mxu0 0
        %309 = vmatprep.subr.bf16.mxu0 0
        %310 = vmatpush1.bf16.msra.mxu0 0
        %311 = vmatprep.subr.bf16.mxu0 0
        %312 = vmatpush1.bf16.msra.mxu0 0
        %313 = vmatprep.subr.bf16.mxu0 0
        %314 = vmatpush1.bf16.msra.mxu0 0
        %315 = vmatprep.mubr.bf16.mxu0 0
        %316 = vmatmul.mubr.bf16.gmra.mrb[0].mxu0 %v278
        %v317 = vpop.f32.mrb[0].mxu0
        %v318 = vadd.f32 %v262, %v317
        %v319 = vpop.f32.mrb[0].mxu0
        %v320 = vpop.f32.mrb[0].mxu0
        %v321 = vadd.f32 %v262, %v320
        %v322 = vpop.f32.mrb[0].mxu0
        %323 = vmatprep.mubr.bf16.mxu0 0
        %324 = vmatmul.mubr.bf16.gmra.mrb[0].mxu0 %v281
        %v325 = vpop.f32.mrb[0].mxu0
        %v326 = vadd.f32 %v262, %v325
        %v327 = vpop.f32.mrb[0].mxu0
        %v328 = vpop.f32.mrb[0].mxu0
        %v329 = vadd.f32 %v262, %v328
        %v330 = vpop.f32.mrb[0].mxu0
        %331 = vdwg.mxu0
        %v332 = vmax.f32 %v318, 0.0
        %v333 = vmax.f32 %v321, 0.0
        %v334 = vmax.f32 %v326, 0.0
        %v335 = vmax.f32 %v329, 0.0
        %v336 = vpack.c.bf16 %v333, %v332
        %v337 = vpack.c.bf16 %v335, %v334
        %v338 = vld [vmem:[%s3] sm:$0xf]
        %v339 = vld [vmem:[%s3 + $0x4] sm:$0xf]
        %v340 = vld [vmem:[%s3 + $0x8] sm:$0xf]
        %v341 = vld [vmem:[%s3 + $0xc] sm:$0xf]
        %v342 = vld [vmem:[%s3 + $0x10] sm:$0xf]
        %v343 = vld [vmem:[%s3 + $0x14] sm:$0xf]
        %v344 = vld [vmem:[%s3 + $0x18] sm:$0xf]
        %v345 = vld [vmem:[%s3 + $0x1c] sm:$0xf]
        %v346 = vld [vmem:[%s3 + $0x20] sm:$0xf]
        %v347 = vld [vmem:[%s3 + $0x24] sm:$0xf]
        %v348 = vld [vmem:[%s3 + $0x28] sm:$0xf]
        %v349 = vld [vmem:[%s3 + $0x2c] sm:$0xf]
        %v350 = vld [vmem:[%s3 + $0x30] sm:$0xf]
        %v351 = vld [vmem:[%s3 + $0x34] sm:$0xf]
        %v352 = vld [vmem:[%s3 + $0x38] sm:$0xf]
        %v353 = vld [vmem:[%s3 + $0x3c] sm:$0xf]
        %v354 = vld [vmem:[%s4] sm:$0x1]
        %v356 = vlaneseq
        %v357 = vshrl.u32 %v356, 7
        %v358 = vsub.s32 0, %v357
        %v359 = vrot.slane %v354, %v358
        %v377 = vunpack.c.l.b16 %v338
        %v378 = vunpack.c.l.b16 %v339
        %v379 = vunpack.c.l.b16 %v340
        %v380 = vunpack.c.l.b16 %v341
        %v381 = vunpack.c.l.b16 %v342
        %v382 = vunpack.c.l.b16 %v343
        %v383 = vunpack.c.l.b16 %v344
        %v384 = vunpack.c.l.b16 %v345
        %v385 = vunpack.c.l.b16 %v346
        %v386 = vunpack.c.l.b16 %v347
        %v387 = vunpack.c.l.b16 %v348
        %v388 = vunpack.c.l.b16 %v349
        %v389 = vunpack.c.l.b16 %v350
        %v390 = vunpack.c.l.b16 %v351
        %v391 = vunpack.c.l.b16 %v352
        %v392 = vunpack.c.l.b16 %v353
        %v393 = vpack.c.b16 %v378, %v377
        %v394 = vpack.c.b16 %v380, %v379
        %v395 = vpack.c.b16 %v382, %v381
        %v396 = vpack.c.b16 %v384, %v383
        %v397 = vpack.c.b16 %v386, %v385
        %v398 = vpack.c.b16 %v388, %v387
        %v399 = vpack.c.b16 %v390, %v389
        %v400 = vpack.c.b16 %v392, %v391
        %409 = vmatprep.subr.bf16.mxu0 0
        %410 = vmatpush1.bf16.msra.mxu0 %v393
        %411 = vmatprep.subr.bf16.mxu0 0
        %412 = vmatpush1.bf16.msra.mxu0 %v394
        %413 = vmatprep.subr.bf16.mxu0 0
        %414 = vmatpush1.bf16.msra.mxu0 %v395
        %415 = vmatprep.subr.bf16.mxu0 0
        %416 = vmatpush1.bf16.msra.mxu0 %v396
        %417 = vmatprep.subr.bf16.mxu0 0
        %418 = vmatpush1.bf16.msra.mxu0 %v397
        %419 = vmatprep.subr.bf16.mxu0 0
        %420 = vmatpush1.bf16.msra.mxu0 %v398
        %421 = vmatprep.subr.bf16.mxu0 0
        %422 = vmatpush1.bf16.msra.mxu0 %v399
        %423 = vmatprep.subr.bf16.mxu0 0
        %424 = vmatpush1.bf16.msra.mxu0 %v400
        %425 = vmatprep.subr.bf16.mxu0 0
        %426 = vmatpush1.bf16.msra.mxu0 0
        %427 = vmatprep.subr.bf16.mxu0 0
        %428 = vmatpush1.bf16.msra.mxu0 0
        %429 = vmatprep.subr.bf16.mxu0 0
        %430 = vmatpush1.bf16.msra.mxu0 0
        %431 = vmatprep.subr.bf16.mxu0 0
        %432 = vmatpush1.bf16.msra.mxu0 0
        %433 = vmatprep.subr.bf16.mxu0 0
        %434 = vmatpush1.bf16.msra.mxu0 0
        %435 = vmatprep.subr.bf16.mxu0 0
        %436 = vmatpush1.bf16.msra.mxu0 0
        %437 = vmatprep.subr.bf16.mxu0 0
        %438 = vmatpush1.bf16.msra.mxu0 0
        %439 = vmatprep.subr.bf16.mxu0 0
        %440 = vmatpush1.bf16.msra.mxu0 0
        %441 = vmatprep.mubr.bf16.mxu0 0
        %442 = vmatmul.mubr.bf16.gmra.mrb[0].mxu0 %v336
        %v443 = vpop.f32.mrb[0].mxu0
        %v444 = vadd.f32 %v359, %v443
        %v445 = vpop.f32.mrb[0].mxu0
        %v446 = vpop.f32.mrb[0].mxu0
        %v447 = vadd.f32 %v359, %v446
        %v448 = vpop.f32.mrb[0].mxu0
        %449 = vmatprep.mubr.bf16.mxu0 0
        %450 = vmatmul.mubr.bf16.gmra.mrb[0].mxu0 %v337
        %v451 = vpop.f32.mrb[0].mxu0
        %v452 = vadd.f32 %v359, %v451
        %v453 = vpop.f32.mrb[0].mxu0
        %v454 = vpop.f32.mrb[0].mxu0
        %v455 = vadd.f32 %v359, %v454
        %v456 = vpop.f32.mrb[0].mxu0
        %457 = vdwg.mxu0
        %vm458 = vcmask 80896
        %459 = vst.msk [vmem:[%s226] sm:$0xff] %vm458, %v444
        %460 = vst.msk [vmem:[%s226 + $0x8] sm:$0xff] %vm458, %v447
        %461 = vst.msk [vmem:[%s226 + $0x10] sm:$0xff] %vm458, %v452
        %462 = vst.msk [vmem:[%s226 + $0x18] sm:$0xff] %vm458, %v455
        %s463 = sand.u32 %s134, 1
        %s464 = sand.u32 %s134, 1
        %s465 = smul.addr %s464, 32
        %s466 = scalar_lea.vmem [#allocation2], %s465
        // Predicated region
        $region41: #{linear_classifier_forward.1} parent=39 // pred_check
          %p467 = pneg %p144
        $region42: #{linear_classifier_forward.1} parent=39 // pred_check_branch
          %469 = sbr.rel (%p467) target = $region44
        $region43: #{linear_classifier_forward.1} parent=39 // pred_region
          %s470 = smul.u32 4, %s16
          %s471 = ssub.s32 6, %s470
          %p472 = scmp.lt.s32.totalorder %s471, 4
          %s473 = scalar_select %p472, %s471, 4
          %s474 = smul.u32 128, %s473
          %p475 = scmp.ne.s32.totalorder 0, %s474
          %s476 = smul.addr %s470, 8
          %s477 = scalar_lea.vmem %s5, %s476
          // Predicated region
          $region45: #{linear_classifier_forward.1} parent=43 // pred_check
            %p478 = pneg %p475
          $region46: #{linear_classifier_forward.1} parent=43 // pred_check_branch
            %480 = sbr.rel (%p478) target = $region48
          $region47: #{linear_classifier_forward.1} parent=43 // pred_region
            // Predicated region
            $region49: #{linear_classifier_forward.1} parent=47 // pred_check
              _
            $region50: #{linear_classifier_forward.1} parent=47 // pred_check_branch
              %482 = sbr.rel (0) target = $region52
            $region51: #{linear_classifier_forward.1} parent=47 // pred_region
              // Predicated region
              $region71: #{linear_classifier_forward.1} parent=51 // pred_check
                _
              $region72: #{linear_classifier_forward.1} parent=51 // pred_check_branch
                %537 = sbr.rel (0) target = $region74
              $region73: #{linear_classifier_forward.1} parent=51 // pred_region
                %s538 = sshrl.u32 %s473, 2
                // While loop
                $region75: #{linear_classifier_forward.1} parent=73 // loop_pre_header
                  _
                $region76: #{linear_classifier_forward.1} parent=73 // loop_header
                  %s540 = sphi 0, %s542
                  %p541 = scmp.ge.s32.totalorder %s540, %s538
                  %s545 = sphi 0, %s558
                  %s546 = sphi %s466, %s561
                  %s547 = sphi %s477, %s562
                $region77: #{linear_classifier_forward.1} parent=73 // loop_header_branch
                  %544 = sbr.rel (%p541) target = $region81
                $region78: #{linear_classifier_forward.1} parent=73 // loop_body
                  %v548 = vld [vmem:[%s546] sm:$0xff]
                  %549 = vst [vmem:[%s547] sm:$0xff] %v548
                  %v550 = vld [vmem:[%s546 + $0x8] sm:$0xff]
                  %551 = vst [vmem:[%s547 + $0x8] sm:$0xff] %v550
                  %v552 = vld [vmem:[%s546 + $0x10] sm:$0xff]
                  %553 = vst [vmem:[%s547 + $0x10] sm:$0xff] %v552
                  %v554 = vld [vmem:[%s546 + $0x18] sm:$0xff]
                  %555 = vst [vmem:[%s547 + $0x18] sm:$0xff] %v554
                  %s556 = sadd.s32 1, %s545
                  %p557 = scmp.ge.s32.totalorder %s556, %s538
                  %s558 = scalar_select %p557, 0, %s556
                  %s559 = smul.u32 %s558, 32
                  %s560 = smul.u32 %s558, 32
                  %s561 = scalar_lea.vmem %s466, %s559 [#allocation2]
                  %s562 = scalar_lea.vmem %s477, %s560
                $region79: #{linear_classifier_forward.1} parent=73 // loop_footer
                  %s542 = sadd.s32 %s540, 1
                $region80: #{linear_classifier_forward.1} parent=73 // loop_footer_branch
                  %539 = sbr.rel target = $region76
                $region81: #{linear_classifier_forward.1} parent=73 // loop_exit
                  _
                %s563 = sshrl.u32 %s473, 2
                %s564 = sand.u32 %s473, 3
                %s565 = smul.u32 %s563, 4
                %s566 = smul.u32 8, %s565
                %s567 = scalar_lea.vmem %s466, %s566 [#allocation2]
                %s568 = smul.u32 8, %s565
                %s569 = scalar_lea.vmem %s477, %s568
                // While loop
                $region82: #{linear_classifier_forward.1} parent=73 // loop_pre_header
                  _
                $region83: #{linear_classifier_forward.1} parent=73 // loop_header
                  %s571 = sphi 0, %s573
                  %p572 = scmp.ge.s32.totalorder %s571, %s564
                  %s576 = sphi 0, %s583
                  %s577 = sphi %s567, %s586
                  %s578 = sphi %s569, %s587
                $region84: #{linear_classifier_forward.1} parent=73 // loop_header_branch
                  %575 = sbr.rel (%p572) target = $region88
                $region85: #{linear_classifier_forward.1} parent=73 // loop_body
                  %v579 = vld [vmem:[%s577] sm:$0xff]
                  %580 = vst [vmem:[%s578] sm:$0xff] %v579
                  %s581 = sadd.s32 1, %s576
                  %p582 = scmp.ge.s32.totalorder %s581, %s564
                  %s583 = scalar_select %p582, 0, %s581
                  %s584 = smul.u32 %s583, 8
                  %s585 = smul.u32 %s583, 8
                  %s586 = scalar_lea.vmem %s567, %s584 [#allocation2]
                  %s587 = scalar_lea.vmem %s569, %s585
                $region86: #{linear_classifier_forward.1} parent=73 // loop_footer
                  %s573 = sadd.s32 %s571, 1
                $region87: #{linear_classifier_forward.1} parent=73 // loop_footer_branch
                  %570 = sbr.rel target = $region83
                $region88: #{linear_classifier_forward.1} parent=73 // loop_exit
                  _
              $region74: #{linear_classifier_forward.1} parent=51 // pred_fallthru
                _
              // Predicated region
              $region89: #{linear_classifier_forward.1} parent=51 // pred_check
                _
              $region90: #{linear_classifier_forward.1} parent=51 // pred_check_branch
                %589 = sbr.rel target = $region92
              $region91: #{linear_classifier_forward.1} parent=51 // pred_region
                _
              $region92: #{linear_classifier_forward.1} parent=51 // pred_fallthru
                _
            $region52: #{linear_classifier_forward.1} parent=47 // pred_fallthru
              _
            // Predicated region
            $region53: #{linear_classifier_forward.1} parent=47 // pred_check
              _
            $region54: #{linear_classifier_forward.1} parent=47 // pred_check_branch
              %484 = sbr.rel target = $region56
            $region55: #{linear_classifier_forward.1} parent=47 // pred_region
              %s486 = sshrl.u32 %s473, 2
              // While loop
              $region57: #{linear_classifier_forward.1} parent=55 // loop_pre_header
                _
              $region58: #{linear_classifier_forward.1} parent=55 // loop_header
                %s488 = sphi 0, %s490
                %p489 = scmp.ge.s32.totalorder %s488, %s486
                %s493 = sphi 0, %s506
                %s494 = sphi %s466, %s509
                %s495 = sphi %s477, %s510
              $region59: #{linear_classifier_forward.1} parent=55 // loop_header_branch
                %492 = sbr.rel (%p489) target = $region63
              $region60: #{linear_classifier_forward.1} parent=55 // loop_body
                %v496 = vld [vmem:[%s494] sm:$0xff]
                %497 = vst [vmem:[%s495] sm:$0xff] %v496
                %v498 = vld [vmem:[%s494 + $0x8] sm:$0xff]
                %499 = vst [vmem:[%s495 + $0x8] sm:$0xff] %v498
                %v500 = vld [vmem:[%s494 + $0x10] sm:$0xff]
                %501 = vst [vmem:[%s495 + $0x10] sm:$0xff] %v500
                %v502 = vld [vmem:[%s494 + $0x18] sm:$0xff]
                %503 = vst [vmem:[%s495 + $0x18] sm:$0xff] %v502
                %s504 = sadd.s32 1, %s493
                %p505 = scmp.ge.s32.totalorder %s504, %s486
                %s506 = scalar_select %p505, 0, %s504
                %s507 = smul.u32 %s506, 32
                %s508 = smul.u32 %s506, 32
                %s509 = scalar_lea.vmem %s466, %s507 [#allocation2]
                %s510 = scalar_lea.vmem %s477, %s508
              $region61: #{linear_classifier_forward.1} parent=55 // loop_footer
                %s490 = sadd.s32 %s488, 1
              $region62: #{linear_classifier_forward.1} parent=55 // loop_footer_branch
                %487 = sbr.rel target = $region58
              $region63: #{linear_classifier_forward.1} parent=55 // loop_exit
                _
              %s511 = sshrl.u32 %s473, 2
              %s512 = sand.u32 %s473, 3
              %s513 = smul.u32 %s511, 4
              %s514 = smul.u32 8, %s513
              %s515 = scalar_lea.vmem %s466, %s514 [#allocation2]
              %s516 = smul.u32 8, %s513
              %s517 = scalar_lea.vmem %s477, %s516
              // While loop
              $region64: #{linear_classifier_forward.1} parent=55 // loop_pre_header
                _
              $region65: #{linear_classifier_forward.1} parent=55 // loop_header
                %s519 = sphi 0, %s521
                %p520 = scmp.ge.s32.totalorder %s519, %s512
                %s524 = sphi 0, %s531
                %s525 = sphi %s515, %s534
                %s526 = sphi %s517, %s535
              $region66: #{linear_classifier_forward.1} parent=55 // loop_header_branch
                %523 = sbr.rel (%p520) target = $region70
              $region67: #{linear_classifier_forward.1} parent=55 // loop_body
                %v527 = vld [vmem:[%s525] sm:$0xff]
                %528 = vst [vmem:[%s526] sm:$0xff] %v527
                %s529 = sadd.s32 1, %s524
                %p530 = scmp.ge.s32.totalorder %s529, %s512
                %s531 = scalar_select %p530, 0, %s529
                %s532 = smul.u32 %s531, 8
                %s533 = smul.u32 %s531, 8
                %s534 = scalar_lea.vmem %s515, %s532 [#allocation2]
                %s535 = scalar_lea.vmem %s517, %s533
              $region68: #{linear_classifier_forward.1} parent=55 // loop_footer
                %s521 = sadd.s32 %s519, 1
              $region69: #{linear_classifier_forward.1} parent=55 // loop_footer_branch
                %518 = sbr.rel target = $region65
              $region70: #{linear_classifier_forward.1} parent=55 // loop_exit
                _
            $region56: #{linear_classifier_forward.1} parent=47 // pred_fallthru
              _
          $region48: #{linear_classifier_forward.1} parent=43 // pred_fallthru
            _
          %590 = vnop
        $region44: #{linear_classifier_forward.1} parent=39 // pred_fallthru
          _
      $region40: #{linear_classifier_forward.1} parent=5 // pred_fallthru
        _
      %p591 = scmp.le.s32.totalorder 2, %s11
      // Predicated region
      $region93: #{linear_classifier_forward.1} parent=5 // pred_check
        %p592 = pneg %p591
      $region94: #{linear_classifier_forward.1} parent=5 // pred_check_branch
        %594 = sbr.rel (%p592) target = $region96
      $region95: #{linear_classifier_forward.1} parent=5 // pred_region
        %s595 = ssub.s32 %s11, 2
        // Predicated region
        $region97: #{linear_classifier_forward.1} parent=95 // pred_check
          %p596 = pneg %p150
        $region98: #{linear_classifier_forward.1} parent=95 // pred_check_branch
          %598 = sbr.rel (%p596) target = $region100
        $region99: #{linear_classifier_forward.1} parent=95 // pred_region
          %s599 = sand.u32 %s135, 1
          %s600 = sand.u32 %s135, 1
          %s601 = smul.addr %s600, 32
          %s602 = scalar_lea.vmem [#allocation2], %s601
        $region100: #{linear_classifier_forward.1} parent=95 // pred_fallthru
          _
      $region96: #{linear_classifier_forward.1} parent=5 // pred_fallthru
        _
    $region6: #{linear_classifier_forward.1} parent=1 // loop_footer
      %s15 = sadd.s32 1, %s11
    $region7: #{linear_classifier_forward.1} parent=1 // loop_footer_branch
      %10 = sbr.rel target = $region3
    $region8: #{linear_classifier_forward.1} parent=1 // loop_exit
      _

</llo_original>
